<compile_context>
chip_gen: v5e
topology: v5e:2x2
jax: 0.10.0
libtpu: 0.0.40
codegen_flags: <defaults>
</compile_context>

<pallas_src>
import functools

import jax
import jax.numpy as jnp
from jax import lax
from jax.experimental import pallas as pl
from jax.experimental.pallas import tpu as pltpu

EPS = 1e-8  # PyTorch CosineSimilarity default eps


def _contrastive_loss_kernel(a_ref, p_ref, n_ref, psum_ref, *, margin, batch,
                             tile_b):
    i = pl.program_id(0)

    a = a_ref[...]
    p = p_ref[...]
    n = n_ref[...]

    def rowsum(x, y):
        # Products stay in the input dtype (bf16 products run on the VPU for
        # bf16 inputs -- no f32 copies of the tiles are materialized); the
        # row reduction accumulates in f32.
        return jnp.sum(x * y, axis=1, keepdims=True, dtype=jnp.float32)

    dot_ap = rowsum(a, p)   # (TB, 1)
    dot_an = rowsum(a, n)   # (TB, 1)
    ss_a = rowsum(a, a)     # (TB, 1)
    ss_p = rowsum(p, p)     # (TB, 1)
    ss_n = rowsum(n, n)     # (TB, 1)

    # cos = dot / max(||x||*||y||, eps) == dot * rsqrt(max(ss_x*ss_y, eps^2))
    # rsqrt runs on the EUP slot (otherwise idle) instead of sqrt + divide.
    pos_sim = dot_ap * lax.rsqrt(jnp.maximum(ss_a * ss_p, EPS * EPS))
    neg_sim = dot_an * lax.rsqrt(jnp.maximum(ss_a * ss_n, EPS * EPS))

    # relu(margin - (pos_sim - neg_sim))
    losses = jnp.maximum(jnp.float32(margin) - (pos_sim - neg_sim), 0.0)

    # Mask rows past B in the (padded) last tile.  jnp.where is a select, so
    # garbage in out-of-bounds rows is discarded, never propagated.
    if batch % tile_b != 0:
        row = lax.broadcasted_iota(jnp.int32, (tile_b, 1), 0) + i * tile_b
        losses = jnp.where(row < batch, losses, 0.0)

    partial = jnp.sum(losses)
    # Lane-dense (1, 1, 128) output slab per tile; last two block dims equal
    # the full array dims, so the store is unmasked.
    psum_ref[...] = jnp.full(psum_ref.shape, partial, dtype=jnp.float32)


def _vmem_capacity_bytes():
    try:
        return int(pltpu.get_tpu_info().vmem_capacity_bytes)
    except Exception:
        return 64 * 1024 * 1024  # conservative (v7x per-TC physical VMEM)


def _sublane_align(dtype):
    # f32 -> 8, bf16/f16 -> 16, int8/fp8 -> 32 (sub-32-bit packs along sublanes)
    return max(8, 32 // jnp.dtype(dtype).itemsize)


def _round_up(x, m):
    return ((x + m - 1) // m) * m


def _pick_tile_b(B, D, dtype):
    """Pick a batch tile: per-grid-step input DMA in the multi-MiB range
    (per-step overhead ~0.35us), while keeping the 3x2 double-buffered input
    blocks within a per-generation share of VMEM and keeping >=2 grid steps
    so the 'parallel' batch axis can shard across both v7x TensorCores."""
    itemsize = jnp.dtype(dtype).itemsize
    align = _sublane_align(dtype)
    if B <= align:
        return int(B)

    vmem_cap = _vmem_capacity_bytes()
    # 3/8 of physical VMEM for the 3 inputs x 2 buffers:
    #   v7x (64 MiB)  -> 24 MiB of input buffers (~4 MiB per block)
    #   v5e/v6e (128) -> 40 MiB of input buffers
    input_budget = min((vmem_cap * 3) // 8, 40 * 1024 * 1024)
    tb = input_budget // (3 * 2 * D * itemsize)

    # Keep at least 2 (roughly even) grid steps for v7x megacore sharding.
    half = ((B // 2) // align) * align
    if half >= align:
        tb = min(tb, half)

    tb = (tb // align) * align
    tb = max(tb, align)
    tb = min(tb, _round_up(B, align))
    return int(tb)


def contrastive_loss(anchor, positive, negative, margin=1.0, tile_b=None):
    """anchor, positive, negative: (B, D) arrays. Returns scalar f32 loss.

    Fast path: pass bf16 inputs -- the kernel is HBM-bandwidth bound on every
    TPU generation, so halving input bytes is a near-2x wall-clock win; the
    reductions and cosine math still accumulate in f32 inside the kernel.
    """
    B, D = anchor.shape
    assert positive.shape == (B, D) and negative.shape == (B, D)
    assert positive.dtype == anchor.dtype and negative.dtype == anchor.dtype

    itemsize = jnp.dtype(anchor.dtype).itemsize
    if tile_b is None:
        tile_b = _pick_tile_b(B, D, anchor.dtype)
    num_tiles = pl.cdiv(B, tile_b)

    kernel = functools.partial(
        _contrastive_loss_kernel, margin=float(margin), batch=B, tile_b=tile_b)

    in_spec = pl.BlockSpec((tile_b, D), lambda i: (i, 0))

    # Explicit scoped-VMEM limit: double-buffered input blocks + a couple of
    # f32 tile-sized temporaries + margin, kept under physical VMEM.
    vmem_cap = _vmem_capacity_bytes()
    in_block_bytes = 3 * tile_b * D * itemsize
    temp_bytes = 2 * tile_b * D * 4
    vmem_limit = 2 * in_block_bytes + temp_bytes + (8 << 20)
    vmem_limit = int(max(16 << 20, min(vmem_limit, vmem_cap - (4 << 20))))

    cost = pl.CostEstimate(
        flops=10 * B * D,
        transcendentals=2 * B,
        bytes_accessed=3 * B * D * itemsize + int(num_tiles) * 128 * 4,
    )

    partials = pl.pallas_call(
        kernel,
        out_shape=jax.ShapeDtypeStruct((num_tiles, 1, 128), jnp.float32),
        grid_spec=pltpu.PrefetchScalarGridSpec(
            num_scalar_prefetch=0,
            grid=(num_tiles,),
            in_specs=[in_spec, in_spec, in_spec],
            out_specs=pl.BlockSpec((1, 1, 128), lambda i: (i, 0, 0)),
        ),
        compiler_params=pltpu.CompilerParams(
            # Each grid step writes a distinct output block -> batch axis can
            # shard across both TensorCores on v7x.
            dimension_semantics=("parallel",),
            vmem_limit_bytes=vmem_limit,
        ),
        cost_estimate=cost,
    )(anchor, positive, negative)

    # Tiny final reduction over per-tile partial sums in plain JAX.
    return jnp.sum(partials[:, 0, 0]) / jnp.float32(B)


def _reference_loss(anchor, positive, negative, margin=1.0):
    # Pure-JAX reference mirroring the PyTorch module.
    def cos(x, y):
        dot = jnp.sum(x * y, axis=1)
        nx = jnp.linalg.norm(x, axis=1)
        ny = jnp.linalg.norm(y, axis=1)
        return dot / jnp.maximum(nx * ny, EPS)

    pos_sim = cos(anchor, positive)
    neg_sim = cos(anchor, negative)
    losses = jax.nn.relu(margin - (pos_sim - neg_sim))
    return jnp.mean(losses)


if __name__ == "__main__":
    key = jax.random.PRNGKey(0)
    k1, k2, k3 = jax.random.split(key, 3)

    # Small shapes; B=50 with tile_b=16 exercises multi-tile pipelining AND the
    # ragged (masked) last batch tile.
    B, D = 50, 128
    anchor = jax.random.normal(k1, (B, D), dtype=jnp.float32)
    positive = jax.random.normal(k2, (B, D), dtype=jnp.float32)
    negative = jax.random.normal(k3, (B, D), dtype=jnp.float32)

    ref = _reference_loss(anchor, positive, negative, margin=1.0)

    # Explicit small tile (multi-tile + ragged last tile).
    loss = contrastive_loss(anchor, positive, negative, margin=1.0, tile_b=16)
    jax.block_until_ready(loss)
    assert jnp.allclose(loss, ref, rtol=1e-5, atol=1e-5), (loss, ref)

    # Auto tile selection (exercises _pick_tile_b + vmem_limit path).
    loss_auto = contrastive_loss(anchor, positive, negative, margin=1.0)
    jax.block_until_ready(loss_auto)
    assert jnp.allclose(loss_auto, ref, rtol=1e-5, atol=1e-5), (loss_auto, ref)

    # bf16 inputs (half the HBM bytes); bf16 products, f32 accumulation.
    loss_bf16 = contrastive_loss(
        anchor.astype(jnp.bfloat16),
        positive.astype(jnp.bfloat16),
        negative.astype(jnp.bfloat16),
        margin=1.0, tile_b=16)
    jax.block_until_ready(loss_bf16)
    assert jnp.allclose(loss_bf16, ref, rtol=3e-2, atol=3e-2), (loss_bf16, ref)

    print("KERNEL_OK")
</pallas_src>

<mosaic_0001>
module attributes {stable_mosaic.version = 11 : i64} {
  func.func @_contrastive_loss_kernel(%arg0: i32, %arg1: memref<16x128xf32, #tpu.memory_space<vmem>>, %arg2: memref<16x128xf32, #tpu.memory_space<vmem>>, %arg3: memref<16x128xf32, #tpu.memory_space<vmem>>, %arg4: memref<1x1x128xf32, #tpu.memory_space<vmem>>) attributes {dimension_semantics = [#tpu.dimension_semantics<parallel>], iteration_bounds = array<i64: 4>, scalar_prefetch = 0 : i64, scratch_operands = 0 : i64, tpu.core_type = #tpu.core_type<tc>, window_params = [{transform_indices = @transform_0, window_bounds = array<i64: 16, 128>}, {transform_indices = @transform_1, window_bounds = array<i64: 16, 128>}, {transform_indices = @transform_2, window_bounds = array<i64: 16, 128>}, {transform_indices = @transform_3, window_bounds = array<i64: 1, 1, 128>}]} {
    %c0 = arith.constant 0 : index
    %c0_0 = arith.constant 0 : index
    %0 = vector.load %arg1[%c0, %c0_0] : memref<16x128xf32, #tpu.memory_space<vmem>>, vector<16x128xf32>
    %c0_1 = arith.constant 0 : index
    %c0_2 = arith.constant 0 : index
    %1 = vector.load %arg2[%c0_1, %c0_2] : memref<16x128xf32, #tpu.memory_space<vmem>>, vector<16x128xf32>
    %c0_3 = arith.constant 0 : index
    %c0_4 = arith.constant 0 : index
    %2 = vector.load %arg3[%c0_3, %c0_4] : memref<16x128xf32, #tpu.memory_space<vmem>>, vector<16x128xf32>
    %3 = arith.mulf %0, %1 : vector<16x128xf32>
    %cst = arith.constant dense<0.000000e+00> : vector<16xf32>
    %4 = vector.multi_reduction <add>, %3, %cst [1] : vector<16x128xf32> to vector<16xf32>
    %5 = vector.shape_cast %4 : vector<16xf32> to vector<16x1xf32>
    %6 = arith.mulf %0, %2 : vector<16x128xf32>
    %cst_5 = arith.constant dense<0.000000e+00> : vector<16xf32>
    %7 = vector.multi_reduction <add>, %6, %cst_5 [1] : vector<16x128xf32> to vector<16xf32>
    %8 = vector.shape_cast %7 : vector<16xf32> to vector<16x1xf32>
    %9 = arith.mulf %0, %0 : vector<16x128xf32>
    %cst_6 = arith.constant dense<0.000000e+00> : vector<16xf32>
    %10 = vector.multi_reduction <add>, %9, %cst_6 [1] : vector<16x128xf32> to vector<16xf32>
    %11 = vector.shape_cast %10 : vector<16xf32> to vector<16x1xf32>
    %12 = arith.mulf %1, %1 : vector<16x128xf32>
    %cst_7 = arith.constant dense<0.000000e+00> : vector<16xf32>
    %13 = vector.multi_reduction <add>, %12, %cst_7 [1] : vector<16x128xf32> to vector<16xf32>
    %14 = vector.shape_cast %13 : vector<16xf32> to vector<16x1xf32>
    %15 = arith.mulf %2, %2 : vector<16x128xf32>
    %cst_8 = arith.constant dense<0.000000e+00> : vector<16xf32>
    %16 = vector.multi_reduction <add>, %15, %cst_8 [1] : vector<16x128xf32> to vector<16xf32>
    %17 = vector.shape_cast %16 : vector<16xf32> to vector<16x1xf32>
    %18 = arith.mulf %11, %14 : vector<16x1xf32>
    %cst_9 = arith.constant 1.000000e-16 : f32
    %19 = vector.broadcast %cst_9 : f32 to vector<16x1xf32>
    %20 = arith.maximumf %18, %19 : vector<16x1xf32>
    %21 = math.rsqrt %20 : vector<16x1xf32>
    %22 = arith.mulf %5, %21 : vector<16x1xf32>
    %23 = arith.mulf %11, %17 : vector<16x1xf32>
    %cst_10 = arith.constant 1.000000e-16 : f32
    %24 = vector.broadcast %cst_10 : f32 to vector<16x1xf32>
    %25 = arith.maximumf %23, %24 : vector<16x1xf32>
    %26 = math.rsqrt %25 : vector<16x1xf32>
    %27 = arith.mulf %8, %26 : vector<16x1xf32>
    %28 = arith.subf %22, %27 : vector<16x1xf32>
    %cst_11 = arith.constant 1.000000e+00 : f32
    %29 = vector.broadcast %cst_11 : f32 to vector<16x1xf32>
    %30 = arith.subf %29, %28 : vector<16x1xf32>
    %cst_12 = arith.constant 0.000000e+00 : f32
    %31 = vector.broadcast %cst_12 : f32 to vector<16x1xf32>
    %32 = arith.maximumf %30, %31 : vector<16x1xf32>
    %33 = tpu.iota {dimensions = array<i32: 0>} : vector<16x1xi32>
    %c16_i32 = arith.constant 16 : i32
    %34 = arith.muli %arg0, %c16_i32 : i32
    %35 = vector.broadcast %34 : i32 to vector<16x1xi32>
    %36 = arith.addi %33, %35 : vector<16x1xi32>
    %c50_i32 = arith.constant 50 : i32
    %37 = vector.broadcast %c50_i32 : i32 to vector<16x1xi32>
    %38 = arith.cmpi slt, %36, %37 : vector<16x1xi32>
    %cst_13 = arith.constant 0.000000e+00 : f32
    %39 = vector.broadcast %cst_13 : f32 to vector<16x1xf32>
    %40 = arith.select %38, %32, %39 : vector<16x1xi1>, vector<16x1xf32>
    %41 = vector.shape_cast %40 : vector<16x1xf32> to vector<1x16x1xf32>
    %cst_14 = arith.constant dense<0.000000e+00> : vector<1xf32>
    %42 = vector.multi_reduction <add>, %41, %cst_14 [1, 2] : vector<1x16x1xf32> to vector<1xf32>
    %43 = vector.shape_cast %42 : vector<1xf32> to vector<1x1x1xf32>
    %44 = vector.extract %43[0, 0, 0] : f32 from vector<1x1x1xf32>
    %45 = vector.broadcast %44 : f32 to vector<1x1x128xf32>
    %c0_15 = arith.constant 0 : index
    %c0_16 = arith.constant 0 : index
    %c0_17 = arith.constant 0 : index
    %46 = vector.load %arg4[%c0_15, %c0_16, %c0_17] : memref<1x1x128xf32, #tpu.memory_space<vmem>>, vector<1x1x128xf32>
    tpu.vector_store %arg4[%c0_15, %c0_16, %c0_17], %45 {strides = array<i32>} : memref<1x1x128xf32, #tpu.memory_space<vmem>>, vector<1x1x128xf32>,
    return
  }
  func.func @transform_0(%arg0: i32) -> (i32, i32) {
    %c0_i32 = arith.constant 0 : i32
    %c0_i32_0 = arith.constant 0 : i32
    return %arg0, %c0_i32 : i32, i32
  }
  func.func @transform_1(%arg0: i32) -> (i32, i32) {
    %c0_i32 = arith.constant 0 : i32
    %c0_i32_0 = arith.constant 0 : i32
    return %arg0, %c0_i32 : i32, i32
  }
  func.func @transform_2(%arg0: i32) -> (i32, i32) {
    %c0_i32 = arith.constant 0 : i32
    %c0_i32_0 = arith.constant 0 : i32
    return %arg0, %c0_i32 : i32, i32
  }
  func.func @transform_3(%arg0: i32) -> (i32, i32, i32) {
    %c0_i32 = arith.constant 0 : i32
    %c0_i32_0 = arith.constant 0 : i32
    %c0_i32_1 = arith.constant 0 : i32
    return %arg0, %c0_i32, %c0_i32_0 : i32, i32, i32
  }
}

</mosaic_0001>

<llo_original>
// kernel: tpu_custom_call.1
$region0: #{tpu_custom_call.1}
  #allocation0 [shape = 'u32[]', space=smem, size = 0x4, offset = 0x4, fixed_abs, tag = 'smem constant byte address 0x4 - core index']
  #allocation1 [shape = 'u32[72,128]{1,0:T(1,128)}', space=vmem, size = 0x9000, scoped, tag = 'internal scratch']
  %s0 = inlined_call_operand.hbm [shape: f32[50,128], index: 0, kind: input, shape index: {}]
  %s1 = inlined_call_operand.hbm [shape: f32[50,128], index: 1, kind: input, shape index: {}]
  %s2 = inlined_call_operand.hbm [shape: f32[50,128], index: 2, kind: input, shape index: {}]
  %s3 = inlined_call_operand.hbm [shape: f32[4,1,128], index: 3, kind: output, shape index: {}]
  %s4 = sld [smem:[#allocation0]]
  $region57: #{tpu_custom_call.1} parent=0
    _
  %s6 = ssub.s32 1, %s4
  %s7 = scalar_select 0, %s6, %s4
  $region1: #{tpu_custom_call.1} parent=0
    #allocation2 [shape = 'u8[16384]{0}', space=vmem, size = 0x4000, scoped, tag = 'input window, operand 0']
    #allocation3 [shape = 's32[2]{0}', space=sflag, size = 0x8, scoped, tag = 'scoped memory for tpu_custom_call.1']
    #allocation4 [shape = 's32[2]{0}', space=sflag, size = 0x8, scoped, tag = 'scoped memory for tpu_custom_call.1']
    #allocation5 [shape = 'u8[16384]{0}', space=vmem, size = 0x4000, scoped, tag = 'input window, operand 1']
    #allocation6 [shape = 's32[2]{0}', space=sflag, size = 0x8, scoped, tag = 'scoped memory for tpu_custom_call.1']
    #allocation7 [shape = 'u8[16384]{0}', space=vmem, size = 0x4000, scoped, tag = 'input window, operand 2']
    #allocation8 [shape = 'u8[1024]{0}', space=vmem, size = 0x400, scoped, tag = 'output window, operand 0']
    %8 = vsyncpa [#allocation3], 0
    %s9 = scalar_lea.sflag [#allocation3], 1
    %10 = vsyncpa %s9, 0
    %11 = vsyncpa [#allocation6], 0
    %s12 = scalar_lea.sflag [#allocation6], 1
    %13 = vsyncpa %s12, 0
    %14 = vsyncpa [#allocation4], 0
    %s15 = scalar_lea.sflag [#allocation4], 1
    %16 = vsyncpa %s15, 0
    loop: start=0, step=1, limit=6
    $region2: #{tpu_custom_call.1} parent=1 // loop_pre_header
      _
    $region3: #{tpu_custom_call.1} parent=1 // loop_header
      %s18 = sphi 0, %s22
      %p19 = scmp.ge.s32.totalorder %s18, 6
      %s28 = sphi 0, %s30
      %s31 = sphi 0, %s28
      %s32 = sphi 0, %s31
      %s48 = sphi 0, %s32
      %s54 = sphi 0, %s56
      %s57 = sphi 0, %s54
      %s58 = sphi 0, %s57
      %s74 = sphi 0, %s58
      %s80 = sphi 0, %s82
      %s83 = sphi 0, %s80
      %s84 = sphi 0, %s83
      %s100 = sphi 0, %s84
      %s106 = sphi 0, %s108
      %s109 = sphi 0, %s106
      %s110 = sphi 0, %s109
      %s126 = sphi 0, %s110
    $region4: #{tpu_custom_call.1} parent=1 // loop_header_branch
      %21 = sbr.rel (%p19) target = $region8
    $region5: #{tpu_custom_call.1} parent=1 // loop_body
      %s23 = ssub.s32 %s18, 1
      %s24 = ssub.s32 %s18, 2
      %s25 = sadd.s32 %s18, 1
      %s26 = ssub.s32 %s18, %s25
      %p27 = scmp.eq.s32.totalorder %s26, 0
      %s29 = sadd.s32 %s28, 1
      %s30 = scalar_select %p27, %s28, %s29
      %p33 = pneg %p27
      %p34 = scmp.eq.s32.totalorder %s18, 3
      %p35 = por %p33, %p34
      %p36 = scmp.ne.s32.totalorder %s28, %s31
      %p37 = scmp.eq.s32.totalorder %s18, 0
      %p38 = por %p36, %p37
      %p39 = scmp.ne.s32.totalorder %s28, %s31
      %p40 = scmp.eq.s32.totalorder %s23, 3
      %p41 = por %p39, %p40
      %p42 = scmp.ne.s32.totalorder %s31, %s32
      %p43 = scmp.eq.s32.totalorder %s23, 0
      %p44 = por %p42, %p43
      %p45 = scmp.ne.s32.totalorder %s31, %s32
      %p46 = scmp.eq.s32.totalorder %s24, 3
      %p47 = por %p45, %p46
      %p49 = scmp.ne.s32.totalorder %s32, %s48
      %p50 = scmp.eq.s32.totalorder %s24, 0
      %p51 = por %p49, %p50
      %s52 = ssub.s32 %s18, %s25
      %p53 = scmp.eq.s32.totalorder %s52, 0
      %s55 = sadd.s32 %s54, 1
      %s56 = scalar_select %p53, %s54, %s55
      %p59 = pneg %p53
      %p60 = scmp.eq.s32.totalorder %s18, 3
      %p61 = por %p59, %p60
      %p62 = scmp.ne.s32.totalorder %s54, %s57
      %p63 = scmp.eq.s32.totalorder %s18, 0
      %p64 = por %p62, %p63
      %p65 = scmp.ne.s32.totalorder %s54, %s57
      %p66 = scmp.eq.s32.totalorder %s23, 3
      %p67 = por %p65, %p66
      %p68 = scmp.ne.s32.totalorder %s57, %s58
      %p69 = scmp.eq.s32.totalorder %s23, 0
      %p70 = por %p68, %p69
      %p71 = scmp.ne.s32.totalorder %s57, %s58
      %p72 = scmp.eq.s32.totalorder %s24, 3
      %p73 = por %p71, %p72
      %p75 = scmp.ne.s32.totalorder %s58, %s74
      %p76 = scmp.eq.s32.totalorder %s24, 0
      %p77 = por %p75, %p76
      %s78 = ssub.s32 %s18, %s25
      %p79 = scmp.eq.s32.totalorder %s78, 0
      %s81 = sadd.s32 %s80, 1
      %s82 = scalar_select %p79, %s80, %s81
      %p85 = pneg %p79
      %p86 = scmp.eq.s32.totalorder %s18, 3
      %p87 = por %p85, %p86
      %p88 = scmp.ne.s32.totalorder %s80, %s83
      %p89 = scmp.eq.s32.totalorder %s18, 0
      %p90 = por %p88, %p89
      %p91 = scmp.ne.s32.totalorder %s80, %s83
      %p92 = scmp.eq.s32.totalorder %s23, 3
      %p93 = por %p91, %p92
      %p94 = scmp.ne.s32.totalorder %s83, %s84
      %p95 = scmp.eq.s32.totalorder %s23, 0
      %p96 = por %p94, %p95
      %p97 = scmp.ne.s32.totalorder %s83, %s84
      %p98 = scmp.eq.s32.totalorder %s24, 3
      %p99 = por %p97, %p98
      %p101 = scmp.ne.s32.totalorder %s84, %s100
      %p102 = scmp.eq.s32.totalorder %s24, 0
      %p103 = por %p101, %p102
      %s104 = ssub.s32 %s18, %s25
      %p105 = scmp.eq.s32.totalorder %s104, 0
      %s107 = sadd.s32 %s106, 1
      %s108 = scalar_select %p105, %s106, %s107
      %p111 = pneg %p105
      %p112 = scmp.eq.s32.totalorder %s18, 3
      %p113 = por %p111, %p112
      %p114 = scmp.ne.s32.totalorder %s106, %s109
      %p115 = scmp.eq.s32.totalorder %s18, 0
      %p116 = por %p114, %p115
      %p117 = scmp.ne.s32.totalorder %s106, %s109
      %p118 = scmp.eq.s32.totalorder %s23, 3
      %p119 = por %p117, %p118
      %p120 = scmp.ne.s32.totalorder %s109, %s110
      %p121 = scmp.eq.s32.totalorder %s23, 0
      %p122 = por %p120, %p121
      %p123 = scmp.ne.s32.totalorder %s109, %s110
      %p124 = scmp.eq.s32.totalorder %s24, 3
      %p125 = por %p123, %p124
      %p127 = scmp.ne.s32.totalorder %s110, %s126
      %p128 = scmp.eq.s32.totalorder %s24, 0
      %p129 = por %p127, %p128
      %p130 = scmp.le.s32.totalorder 1, %s18
      %p131 = scmp.lt.s32.totalorder %s18, 5
      %p132 = pnand %p130, %p131
      %p133 = pneg %p132
      // Predicated region
      $region9: #{tpu_custom_call.1} parent=5 // pred_check
        _
      $region10: #{tpu_custom_call.1} parent=5 // pred_check_branch
        %135 = sbr.rel (%p132) target = $region12
      $region11: #{tpu_custom_call.1} parent=5 // pred_region
        %s136 = ssub.s32 %s18, 1
      $region12: #{tpu_custom_call.1} parent=5 // pred_fallthru
        _
      %p137 = scmp.lt.s32.totalorder %s18, 4
      // Predicated region
      $region13: #{tpu_custom_call.1} parent=5 // pred_check
        %p138 = pneg %p137
      $region14: #{tpu_custom_call.1} parent=5 // pred_check_branch
        %140 = sbr.rel (%p138) target = $region16
      $region15: #{tpu_custom_call.1} parent=5 // pred_region
        // Predicated region
        $region17: #{tpu_custom_call.1} parent=15 // pred_check
          %p141 = pneg %p38
        $region18: #{tpu_custom_call.1} parent=15 // pred_check_branch
          %143 = sbr.rel (%p141) target = $region20
        $region19: #{tpu_custom_call.1} parent=15 // pred_region
          %s144 = sand.u32 %s28, 1
          %s145 = scalar_lea.sflag [#allocation3], %s144
          %s146 = sand.u32 %s28, 1
          %s147 = smul.addr %s146, 16
          %s148 = scalar_lea.vmem [#allocation2], %s147
          %s149 = smul.u32 2, %s18
          %s150 = ssub.s32 7, %s149
          %p151 = scmp.lt.s32.totalorder %s150, 2
          %s152 = scalar_select %p151, %s150, 2
          %s153 = smul.u32 8, %s152
          %s154 = ssub.s32 16, %s153
          %s155 = sshll.u32 %s154, 4
          %156 = vsyncadd %s145, %s155
          %p157 = scmp.ne.s32.totalorder 0, %s153
          %s158 = smul.addr %s149, 8
          %s159 = scalar_lea.hbm %s0, %s158
          %s160 = smul.u32 8, %s152
          %s161 = sshll.u32 %s159, 4
          %s162 = int_to_ptr.hbm [resolvable:$true] %s161
          %s163 = sshll.u32 %s148, 4
          %s164 = int_to_ptr.vmem [resolvable:$true] %s163
          %s165 = sshll.u32 %s160, 4
          %169 = dma.hbm_to_vmem [thread:$0]  (%p157), %s162, %s165, %s164, %s145, 128, 128, 8
        $region20: #{tpu_custom_call.1} parent=15 // pred_fallthru
          _
        // Predicated region
        $region21: #{tpu_custom_call.1} parent=15 // pred_check
          %p170 = pneg %p64
        $region22: #{tpu_custom_call.1} parent=15 // pred_check_branch
          %172 = sbr.rel (%p170) target = $region24
        $region23: #{tpu_custom_call.1} parent=15 // pred_region
          %s173 = sand.u32 %s18, 1
          %s174 = scalar_lea.sflag [#allocation6], %s173
          %s175 = sand.u32 %s54, 1
          %s176 = smul.addr %s175, 16
          %s177 = scalar_lea.vmem [#allocation5], %s176
          %s178 = smul.u32 2, %s18
          %s179 = ssub.s32 7, %s178
          %p180 = scmp.lt.s32.totalorder %s179, 2
          %s181 = scalar_select %p180, %s179, 2
          %s182 = smul.u32 8, %s181
          %s183 = ssub.s32 16, %s182
          %s184 = sshll.u32 %s183, 4
          %185 = vsyncadd %s174, %s184
          %p186 = scmp.ne.s32.totalorder 0, %s182
          %s187 = smul.addr %s178, 8
          %s188 = scalar_lea.hbm %s1, %s187
          %s189 = smul.u32 8, %s181
          %s190 = sshll.u32 %s188, 4
          %s191 = int_to_ptr.hbm [resolvable:$true] %s190
          %s192 = sshll.u32 %s177, 4
          %s193 = int_to_ptr.vmem [resolvable:$true] %s192
          %s194 = sshll.u32 %s189, 4
          %198 = dma.hbm_to_vmem [thread:$0]  (%p186), %s191, %s194, %s193, %s174, 128, 128, 8
        $region24: #{tpu_custom_call.1} parent=15 // pred_fallthru
          _
        // Predicated region
        $region25: #{tpu_custom_call.1} parent=15 // pred_check
          %p199 = pneg %p90
        $region26: #{tpu_custom_call.1} parent=15 // pred_check_branch
          %201 = sbr.rel (%p199) target = $region28
        $region27: #{tpu_custom_call.1} parent=15 // pred_region
          %s202 = sand.u32 %s18, 1
          %s203 = scalar_lea.sflag [#allocation6], %s202
          %s204 = sand.u32 %s80, 1
          %s205 = smul.addr %s204, 16
          %s206 = scalar_lea.vmem [#allocation7], %s205
          %s207 = smul.u32 2, %s18
          %s208 = ssub.s32 7, %s207
          %p209 = scmp.lt.s32.totalorder %s208, 2
          %s210 = scalar_select %p209, %s208, 2
          %s211 = smul.u32 8, %s210
          %s212 = ssub.s32 16, %s211
          %s213 = sshll.u32 %s212, 4
          %214 = vsyncadd %s203, %s213
          %p215 = scmp.ne.s32.totalorder 0, %s211
          %s216 = smul.addr %s207, 8
          %s217 = scalar_lea.hbm %s2, %s216
          %s218 = smul.u32 8, %s210
          %s219 = sshll.u32 %s217, 4
          %s220 = int_to_ptr.hbm [resolvable:$true] %s219
          %s221 = sshll.u32 %s206, 4
          %s222 = int_to_ptr.vmem [resolvable:$true] %s221
          %s223 = sshll.u32 %s218, 4
          %227 = dma.hbm_to_vmem [thread:$0]  (%p215), %s220, %s223, %s222, %s203, 128, 128, 8
        $region28: #{tpu_custom_call.1} parent=15 // pred_fallthru
          _
      $region16: #{tpu_custom_call.1} parent=5 // pred_fallthru
        _
      %p228 = scmp.le.s32.totalorder 1, %s18
      %p229 = scmp.lt.s32.totalorder %s18, 5
      %p230 = pnand %p228, %p229
      %p231 = pneg %p230
      // Predicated region
      $region29: #{tpu_custom_call.1} parent=5 // pred_check
        _
      $region30: #{tpu_custom_call.1} parent=5 // pred_check_branch
        %233 = sbr.rel (%p230) target = $region32
      $region31: #{tpu_custom_call.1} parent=5 // pred_region
        %s234 = ssub.s32 %s18, 1
        %s235 = sand.u32 %s31, 1
        %s236 = scalar_lea.sflag [#allocation3], %s235
        %s237 = sand.u32 %s31, 1
        %s238 = smul.addr %s237, 16
        %s239 = scalar_lea.vmem [#allocation2], %s238
        // Predicated region
        $region33: #{tpu_custom_call.1} parent=31 // pred_check
          %p240 = pneg %p44
        $region34: #{tpu_custom_call.1} parent=31 // pred_check_branch
          %242 = sbr.rel (%p240) target = $region36
        $region35: #{tpu_custom_call.1} parent=31 // pred_region
          %244 = dma.done %s236, 256
        $region36: #{tpu_custom_call.1} parent=31 // pred_fallthru
          _
        %s245 = sand.u32 %s23, 1
        %s246 = scalar_lea.sflag [#allocation6], %s245
        %s247 = sand.u32 %s57, 1
        %s248 = smul.addr %s247, 16
        %s249 = scalar_lea.vmem [#allocation5], %s248
        // Predicated region
        $region37: #{tpu_custom_call.1} parent=31 // pred_check
          %p250 = pneg %p70
        $region38: #{tpu_custom_call.1} parent=31 // pred_check_branch
          %252 = sbr.rel (%p250) target = $region40
        $region39: #{tpu_custom_call.1} parent=31 // pred_region
          %254 = dma.done %s246, 256
        $region40: #{tpu_custom_call.1} parent=31 // pred_fallthru
          _
        %s255 = sand.u32 %s23, 1
        %s256 = scalar_lea.sflag [#allocation6], %s255
        %s257 = sand.u32 %s83, 1
        %s258 = smul.addr %s257, 16
        %s259 = scalar_lea.vmem [#allocation7], %s258
        // Predicated region
        $region41: #{tpu_custom_call.1} parent=31 // pred_check
          %p260 = pneg %p96
        $region42: #{tpu_custom_call.1} parent=31 // pred_check_branch
          %262 = sbr.rel (%p260) target = $region44
        $region43: #{tpu_custom_call.1} parent=31 // pred_region
          %264 = dma.done %s256, 256
        $region44: #{tpu_custom_call.1} parent=31 // pred_fallthru
          _
        %s265 = sand.u32 %s31, 1
        %s266 = scalar_lea.sflag [#allocation3], %s265
        %s267 = sand.u32 %s31, 1
        %s268 = smul.addr %s267, 16
        %s269 = scalar_lea.vmem [#allocation2], %s268
        %p270 = pneg %p44
        %p271 = pneg %p41
        %s272 = sand.u32 %s23, 1
        %s273 = scalar_lea.sflag [#allocation6], %s272
        %s274 = sand.u32 %s57, 1
        %s275 = smul.addr %s274, 16
        %s276 = scalar_lea.vmem [#allocation5], %s275
        %p277 = pneg %p70
        %p278 = pneg %p67
        %s279 = sand.u32 %s23, 1
        %s280 = scalar_lea.sflag [#allocation6], %s279
        %s281 = sand.u32 %s83, 1
        %s282 = smul.addr %s281, 16
        %s283 = scalar_lea.vmem [#allocation7], %s282
        %p284 = pneg %p96
        %p285 = pneg %p93
        %p286 = pneg %p122
        %p287 = pneg %p119
        %s288 = sand.u32 %s109, 1
        %s289 = scalar_lea.sflag [#allocation4], %s288
        %s290 = sand.u32 %s109, 1
        %s291 = scalar_lea.vmem [#allocation8], %s290
        %s292 = smul.u32 2, %s23
        %s293 = ssub.s32 7, %s292
        %p294 = scmp.lt.s32.totalorder %s293, 2
        %s295 = scalar_select %p294, %s293, 2
        %s296 = smul.u32 8, %s295
        %s297 = smul.u32 2, %s23
        %s298 = ssub.s32 7, %s297
        %p299 = scmp.lt.s32.totalorder %s298, 2
        %s300 = scalar_select %p299, %s298, 2
        %s301 = smul.u32 8, %s300
        %s302 = smul.u32 2, %s23
        %s303 = ssub.s32 7, %s302
        %p304 = scmp.lt.s32.totalorder %s303, 2
        %s305 = scalar_select %p304, %s303, 2
        %s306 = smul.u32 8, %s305
        %v307 = vld [vmem:[%s239] sm:$0xff]
        %v308 = vld [vmem:[%s239 + $0x8] sm:$0xff]
        %v309 = vld [vmem:[%s249] sm:$0xff]
        %v310 = vld [vmem:[%s249 + $0x8] sm:$0xff]
        %v311 = vld [vmem:[%s259] sm:$0xff]
        %v312 = vld [vmem:[%s259 + $0x8] sm:$0xff]
        %v313 = vmul.f32 %v307, %v309
        %v314 = vmul.f32 %v308, %v310
        %315 = vadd.xlane.f32.xlu0 %v313
        %v316 = vpop.xlane.xlu0 %315
        %317 = vadd.xlane.f32.xlu0 %v314
        %v318 = vpop.xlane.xlu0 %317
        %v319 = vmul.f32 %v307, %v311
        %v320 = vmul.f32 %v308, %v312
        %321 = vadd.xlane.f32.xlu0 %v319
        %v322 = vpop.xlane.xlu0 %321
        %323 = vadd.xlane.f32.xlu0 %v320
        %v324 = vpop.xlane.xlu0 %323
        %v325 = vmul.f32 %v307, %v307
        %v326 = vmul.f32 %v308, %v308
        %327 = vadd.xlane.f32.xlu0 %v325
        %v328 = vpop.xlane.xlu0 %327
        %329 = vadd.xlane.f32.xlu0 %v326
        %v330 = vpop.xlane.xlu0 %329
        %v331 = vmul.f32 %v309, %v309
        %v332 = vmul.f32 %v310, %v310
        %333 = vadd.xlane.f32.xlu0 %v331
        %v334 = vpop.xlane.xlu0 %333
        %335 = vadd.xlane.f32.xlu0 %v332
        %v336 = vpop.xlane.xlu0 %335
        %v337 = vmul.f32 %v311, %v311
        %v338 = vmul.f32 %v312, %v312
        %339 = vadd.xlane.f32.xlu0 %v337
        %v340 = vpop.xlane.xlu0 %339
        %341 = vadd.xlane.f32.xlu0 %v338
        %v342 = vpop.xlane.xlu0 %341
        %v343 = vmul.f32 %v328, %v334
        %v344 = vmul.f32 %v330, %v336
        %v345 = vmax.f32 %v343, 1e-16
        %v346 = vmax.f32 %v344, 1e-16
        %v347 = vrsqrt.pop %v345
        %v348 = vmul.f32 %v347, %v345
        %v349 = vmul.f32 %v348, %v347
        %v350 = vmul.f32 0.5, %v349
        %v351 = vsub.f32 1.5, %v350
        %v352 = vmul.f32 %v347, %v351
        %vm353 = vweird.f32 %v345
        %vm354 = vweird.f32 %v347
        %vm355 = vmor %vm353, %vm354
        %v356 = vsel %vm355, %v347, %v352
        %v357 = vrsqrt.pop %v346
        %v358 = vmul.f32 %v357, %v346
        %v359 = vmul.f32 %v358, %v357
        %v360 = vmul.f32 0.5, %v359
        %v361 = vsub.f32 1.5, %v360
        %v362 = vmul.f32 %v357, %v361
        %vm363 = vweird.f32 %v346
        %vm364 = vweird.f32 %v357
        %vm365 = vmor %vm363, %vm364
        %v366 = vsel %vm365, %v357, %v362
        %v367 = vmul.f32 %v316, %v356
        %v368 = vmul.f32 %v318, %v366
        %v369 = vmul.f32 %v328, %v340
        %v370 = vmul.f32 %v330, %v342
        %v371 = vmax.f32 %v369, 1e-16
        %v372 = vmax.f32 %v370, 1e-16
        %v373 = vrsqrt.pop %v371
        %v374 = vmul.f32 %v373, %v371
        %v375 = vmul.f32 %v374, %v373
        %v376 = vmul.f32 0.5, %v375
        %v377 = vsub.f32 1.5, %v376
        %v378 = vmul.f32 %v373, %v377
        %vm379 = vweird.f32 %v371
        %vm380 = vweird.f32 %v373
        %vm381 = vmor %vm379, %vm380
        %v382 = vsel %vm381, %v373, %v378
        %v383 = vrsqrt.pop %v372
        %v384 = vmul.f32 %v383, %v372
        %v385 = vmul.f32 %v384, %v383
        %v386 = vmul.f32 0.5, %v385
        %v387 = vsub.f32 1.5, %v386
        %v388 = vmul.f32 %v383, %v387
        %vm389 = vweird.f32 %v372
        %vm390 = vweird.f32 %v383
        %vm391 = vmor %vm389, %vm390
        %v392 = vsel %vm391, %v383, %v388
        %v393 = vmul.f32 %v322, %v382
        %v394 = vmul.f32 %v324, %v392
        %v395 = vsub.f32 %v367, %v393
        %v396 = vsub.f32 %v368, %v394
        %v397 = vsub.f32 1.0, %v395
        %v398 = vsub.f32 1.0, %v396
        %v399 = vmax.f32 %v397, 0.0
        %v400 = vmax.f32 %v398, 0.0
        %v401 = vlaneseq
        %v402 = vshrl.u32 %v401, 7
        %v403 = vadd.s32 %v402, 8
        %s404 = smul.u32 %s23, 16
        %v405 = vstv %s404
        %v406 = vadd.s32 %v402, %v405
        %v407 = vadd.s32 %v403, %v405
        %vm408 = vcmp.lt.s32.totalorder %v406, 50
        %vm409 = vcmp.lt.s32.totalorder %v407, 50
        %v410 = vsel %vm408, %v399, 0.0
        %v411 = vsel %vm409, %v400, 0.0
        %vm412 = vcmask 7168
        %v413 = vsel %vm412, %v410, 0.0
        %v414 = vsel %vm412, %v411, 0.0
        %v415 = vadd.f32 %v413, %v414
        %416 = vadd.xlane.f32.xlu0 %v415
        %v417 = vpop.xlane.xlu0 %416
        %v418 = vrot.slane %v417, 4
        %v419 = vadd.f32 %v417, %v418
        %v420 = vrot.slane %v419, 2
        %v421 = vadd.f32 %v419, %v420
        %v422 = vrot.slane %v421, 1
        %v423 = vadd.f32 %v421, %v422
        %s424 = vtos %v423
        %v425 = vstv %s424
        %426 = vst [vmem:[%s291] sm:$0x1] %v425
        %s427 = sand.u32 %s109, 1
        %s428 = scalar_lea.sflag [#allocation4], %s427
        %s429 = sand.u32 %s109, 1
        %s430 = scalar_lea.vmem [#allocation8], %s429
        // Predicated region
        $region45: #{tpu_custom_call.1} parent=31 // pred_check
          %p431 = pneg %p119
        $region46: #{tpu_custom_call.1} parent=31 // pred_check_branch
          %433 = sbr.rel (%p431) target = $region48
        $region47: #{tpu_custom_call.1} parent=31 // pred_region
          %435 = vsyncadd %s428, 0
          %s436 = scalar_lea.hbm %s3, %s23
          %s438 = sshll.u32 %s430, 4
          %s439 = int_to_ptr.vmem [resolvable:$true] %s438
          %s440 = sshll.u32 %s436, 4
          %s441 = int_to_ptr.hbm [resolvable:$true] %s440
          %443 = dma.vmem_to_hbm [thread:$0]  %s439, 16, %s441, %s428
        $region48: #{tpu_custom_call.1} parent=31 // pred_fallthru
          _
      $region32: #{tpu_custom_call.1} parent=5 // pred_fallthru
        _
      %p444 = scmp.le.s32.totalorder 2, %s18
      // Predicated region
      $region49: #{tpu_custom_call.1} parent=5 // pred_check
        %p445 = pneg %p444
      $region50: #{tpu_custom_call.1} parent=5 // pred_check_branch
        %447 = sbr.rel (%p445) target = $region52
      $region51: #{tpu_custom_call.1} parent=5 // pred_region
        %s448 = ssub.s32 %s18, 2
        // Predicated region
        $region53: #{tpu_custom_call.1} parent=51 // pred_check
          %p449 = pneg %p125
        $region54: #{tpu_custom_call.1} parent=51 // pred_check_branch
          %451 = sbr.rel (%p449) target = $region56
        $region55: #{tpu_custom_call.1} parent=51 // pred_region
          %s452 = sand.u32 %s110, 1
          %s453 = scalar_lea.sflag [#allocation4], %s452
          %s454 = sand.u32 %s110, 1
          %s455 = scalar_lea.vmem [#allocation8], %s454
          %457 = dma.done %s453, 16
        $region56: #{tpu_custom_call.1} parent=51 // pred_fallthru
          _
      $region52: #{tpu_custom_call.1} parent=5 // pred_fallthru
        _
    $region6: #{tpu_custom_call.1} parent=1 // loop_footer
      %s22 = sadd.s32 1, %s18
    $region7: #{tpu_custom_call.1} parent=1 // loop_footer_branch
      %17 = sbr.rel target = $region3
    $region8: #{tpu_custom_call.1} parent=1 // loop_exit
      _
    %458 = vsyncpa [#allocation3], 1
    %s459 = scalar_lea.sflag [#allocation3], 1
    %460 = vsyncpa %s459, 1
    %461 = vsyncpa [#allocation6], 1
    %s462 = scalar_lea.sflag [#allocation6], 1
    %463 = vsyncpa %s462, 1
    %464 = vsyncpa [#allocation4], 1
    %s465 = scalar_lea.sflag [#allocation4], 1
    %466 = vsyncpa %s465, 1

</llo_original>
